<compile_context>
chip_gen: v7x
topology: tpu7x:2x2x1
jax: 0.10.0
libtpu: 0.0.40
codegen_flags: <defaults>
</compile_context>

<pallas_src>
import functools

import jax
import jax.numpy as jnp
from jax.experimental import pallas as pl
from jax.experimental.pallas import tpu as pltpu


# ----------------------------------------------------------------------------- 
# Hardware-aware budgets
# -----------------------------------------------------------------------------
def _tpu_vmem_capacity_bytes():
    try:
        info = pltpu.get_tpu_info()
        cap = getattr(info, "vmem_capacity_bytes", None)
        if cap:
            return int(cap)
    except Exception:
        pass
    return 64 << 20  # conservative default: v7x per-TensorCore VMEM


def _default_vmem_budget(cap):
    # Leave roughly half of VMEM for Mosaic internal scratch / pipeline slack.
    return int(min(cap // 2, 48 << 20))


def _compiler_params(dim_sems, resident_block_bytes, cap):
    # Double-buffering + headroom, floored at 32 MiB, capped at physical VMEM.
    limit = int(min(cap, max(2 * resident_block_bytes + (8 << 20), 32 << 20)))
    # TODO(synk): on v7x verify in the trace that both TensorCores engage; if not,
    # switch the leading grid axis to pltpu.CORE_PARALLEL (plain "parallel" vs
    # "arbitrary" is a measured near-zero delta).
    return pltpu.CompilerParams(dimension_semantics=dim_sems,
                                vmem_limit_bytes=limit)


# -----------------------------------------------------------------------------
# Block planning
# -----------------------------------------------------------------------------
def _block_choices(total, unit):
    """Legal tile sizes along a tiled dim: `total` itself (full dim) plus every
    divisor of `total` that is a multiple of `unit`, descending."""
    choices = [total]
    if total % unit == 0:
        d = total - unit
        while d >= unit:
            if total % d == 0:
                choices.append(d)
            d -= unit
    return choices


def _divisors_desc(n):
    return [d for d in range(n, 0, -1) if n % d == 0]


def _plan_elementwise(N, C, HW, in_item, out_item, budget):
    """Pick (n_blk, c_blk, hw_blk) for elementwise / reduction sweeps.

    Footprint counts what is actually resident per step: double-buffered input +
    double-buffered output (their own dtypes) + a float32 intermediate.
    """
    bytes_per_elem = 2 * in_item + 2 * out_item + 4
    max_elems = max(budget // bytes_per_elem, 8 * 128)
    # ~2 MiB input tiles sit in the measured HBM-roofline sweet spot (~85%).
    target_elems = min(max_elems, max((2 << 20) // max(in_item, 1), 8 * 128))

    c_choices = _block_choices(C, 8)      # full C always legal; else multiples of 8
    hw_choices = _block_choices(HW, 128)  # full HW always legal; else multiples of 128
    n_choices = _divisors_desc(N)

    for limit in (target_elems, max_elems):
        for c_blk in c_choices:            # prefer keeping C whole (per-channel shift)
            for n_blk in n_choices:        # then shrink batch
                for hw_blk in hw_choices:  # then shrink spatial (stays lane-dense >=128)
                    if n_blk * c_blk * hw_blk <= limit:
                        return n_blk, c_blk, hw_blk
    # Nothing legal fits the budget: smallest legal block + explicit vmem_limit headroom.
    return 1, c_choices[-1], hw_choices[-1]


def _plan_training_single_pass(N, C, HW, itemsize, budget):
    """Largest channel block whose full (N, c_blk, HW) slab stays resident, or None."""
    bytes_per_elem = 4 * itemsize + 4   # 2x in + 2x out (same dtype) + f32 intermediate
    for c_blk in _block_choices(C, 8):  # descending -> largest fitting block
        if N * c_blk * HW * bytes_per_elem <= budget:
            return c_blk
    return None


# -----------------------------------------------------------------------------
# Kernels
# -----------------------------------------------------------------------------
def _batch_sum_f32(x_ref):
    """Per-channel partial sums of an (n, c_blk, hw) block.

    Batch-first accumulation (plain VPU adds, never materializes a full
    (n, c_blk, hw) float32 slab), then ONE cross-lane XLU reduce per channel row.
    """
    n = x_ref.shape[0]

    def add_row(i, acc):
        return acc + x_ref[i].astype(jnp.float32)

    s = jax.lax.fori_loop(0, n, add_row,
                          jnp.zeros(x_ref.shape[1:], jnp.float32),
                          unroll=n <= 8)                      # (c_blk, hw) f32
    return jnp.sum(s, axis=-1, keepdims=True)                  # (c_blk, 1) f32


def _centering_train_kernel(momentum, inv_count, x_ref, rm_ref, bias_ref,
                            out_ref, new_rm_ref):
    """Single-pass training forward for one channel block.

    x_ref:      (N, c_blk, HW)
    rm_ref:     (c_blk, 1) f32 running mean
    bias_ref:   (c_blk, 1) f32 bias
    out_ref:    (N, c_blk, HW)  x - new_running_mean + bias
    new_rm_ref: (c_blk, 1) f32 updated running mean
    """
    mean = _batch_sum_f32(x_ref) * inv_count                   # (c_blk, 1)
    new_rm = (1.0 - momentum) * rm_ref[...] + momentum * mean
    new_rm_ref[...] = new_rm
    shift = bias_ref[...] - new_rm                              # (c_blk, 1)
    # Re-read x for the apply instead of reusing a float32 copy of the block,
    # so the upcast temp is never live across both phases.
    out_ref[...] = (x_ref[...].astype(jnp.float32)
                    + shift[None, :, :]).astype(out_ref.dtype)


def _channel_sum_kernel(momentum, inv_count, x_ref, rm_ref, new_rm_ref, acc_ref):
    """Two-sweep pass 1: accumulate per-channel sums over (N, HW) tiles."""
    ni, li = pl.program_id(1), pl.program_id(2)

    @pl.when((ni == 0) & (li == 0))
    def _init():
        acc_ref[...] = jnp.zeros_like(acc_ref)

    acc_ref[...] += _batch_sum_f32(x_ref)

    @pl.when((ni == pl.num_programs(1) - 1) & (li == pl.num_programs(2) - 1))
    def _finalize():
        mean = acc_ref[...] * inv_count
        new_rm_ref[...] = (1.0 - momentum) * rm_ref[...] + momentum * mean


def _apply_shift_kernel(x_ref, shift_ref, out_ref):
    """Elementwise: out = x + (bias - running_mean), shift precomputed per channel.

    Add is done in f32 to match reference numerics; the kernel is HBM-bound so
    VPU width is not the bottleneck (a bf16-native add on v6e/v7x is optional).
    """
    shift = shift_ref[...][None, :, :]                          # (1, c_blk, 1) f32
    out_ref[...] = (x_ref[...].astype(jnp.float32) + shift).astype(out_ref.dtype)


# -----------------------------------------------------------------------------
# pallas_call wrappers
# -----------------------------------------------------------------------------
def _apply_shift(x3d, shift2d, budget, cap):
    N, C, HW = x3d.shape
    item = jnp.dtype(x3d.dtype).itemsize
    n_blk, c_blk, hw_blk = _plan_elementwise(N, C, HW, item, item, budget)
    grid = (N // n_blk, C // c_blk, HW // hw_blk)
    x_spec = pl.BlockSpec((n_blk, c_blk, hw_blk), lambda n, c, l: (n, c, l))
    shift_spec = pl.BlockSpec((c_blk, 1), lambda n, c, l: (c, 0))
    block_bytes = n_blk * c_blk * hw_blk * 2 * item
    cp = _compiler_params(("parallel", "parallel", "parallel"), block_bytes, cap)
    # (Optionally add input_output_aliases={0: 0} when the caller donates x.)
    return pl.pallas_call(
        _apply_shift_kernel,
        out_shape=jax.ShapeDtypeStruct((N, C, HW), x3d.dtype),
        grid_spec=pltpu.PrefetchScalarGridSpec(
            num_scalar_prefetch=0,
            grid=grid,
            in_specs=[x_spec, shift_spec],
            out_specs=x_spec),
        compiler_params=cp,
    )(x3d, shift2d)


def _channel_mean_update(x3d, rm2d, momentum, budget, cap):
    N, C, HW = x3d.shape
    item = jnp.dtype(x3d.dtype).itemsize
    n_blk, c_blk, hw_blk = _plan_elementwise(N, C, HW, item, 0, budget)
    grid = (C // c_blk, N // n_blk, HW // hw_blk)   # reduction axes (N, HW) last
    x_spec = pl.BlockSpec((n_blk, c_blk, hw_blk), lambda c, n, l: (n, c, l))
    vec_spec = pl.BlockSpec((c_blk, 1), lambda c, n, l: (c, 0))
    block_bytes = n_blk * c_blk * hw_blk * item
    cp = _compiler_params(("parallel", "arbitrary", "arbitrary"), block_bytes, cap)
    kernel = functools.partial(_channel_sum_kernel, float(momentum),
                               1.0 / float(N * HW))
    return pl.pallas_call(
        kernel,
        out_shape=jax.ShapeDtypeStruct((C, 1), jnp.float32),
        grid_spec=pltpu.PrefetchScalarGridSpec(
            num_scalar_prefetch=0,
            grid=grid,
            in_specs=[x_spec, vec_spec],
            out_specs=vec_spec,
            scratch_shapes=[pltpu.VMEM((c_blk, 1), jnp.float32)]),
        compiler_params=cp,
    )(x3d, rm2d)


def batch_centering_2d(x, running_mean, bias, *, momentum=0.1, training=True,
                       vmem_budget_bytes=None):
    """JAX/Pallas equivalent of BatchCentering2D.forward.

    training=True:  returns (out NCHW, new_running_mean (1, C, 1, 1) float32)
    training=False: returns out NCHW
    """
    N, C, H, W = x.shape
    HW = H * W
    item = jnp.dtype(x.dtype).itemsize

    cap = _tpu_vmem_capacity_bytes()
    budget = (int(vmem_budget_bytes) if vmem_budget_bytes is not None
              else _default_vmem_budget(cap))

    x3d = x.reshape(N, C, HW)   # free reshape (merges trailing dims), no transpose

    rm_flat = jnp.asarray(running_mean, dtype=jnp.float32).reshape(-1)
    if rm_flat.shape[0] != C:
        rm_flat = jnp.broadcast_to(rm_flat, (C,))
    rm2d = rm_flat.reshape(C, 1)
    bias2d = jnp.asarray(bias, dtype=jnp.float32).reshape(C, 1)

    if not training:
        shift2d = bias2d - rm2d                    # tiny (C,1) fold, done once
        out3d = _apply_shift(x3d, shift2d, budget, cap)
        return out3d.reshape(N, C, H, W)

    c_blk = _plan_training_single_pass(N, C, HW, item, budget)
    if c_blk is not None:
        # Single fused pass: one read + one write of x.
        grid = (C // c_blk,)
        x_spec = pl.BlockSpec((N, c_blk, HW), lambda c: (0, c, 0))
        vec_spec = pl.BlockSpec((c_blk, 1), lambda c: (c, 0))
        block_bytes = N * c_blk * HW * 2 * item
        cp = _compiler_params(("parallel",), block_bytes, cap)
        kernel = functools.partial(_centering_train_kernel, float(momentum),
                                   1.0 / float(N * HW))
        out3d, new_rm2d = pl.pallas_call(
            kernel,
            out_shape=(jax.ShapeDtypeStruct((N, C, HW), x.dtype),
                       jax.ShapeDtypeStruct((C, 1), jnp.float32)),
            grid_spec=pltpu.PrefetchScalarGridSpec(
                num_scalar_prefetch=0,
                grid=grid,
                in_specs=[x_spec, vec_spec, vec_spec],
                out_specs=[x_spec, vec_spec]),
            compiler_params=cp,
        )(x3d, rm2d, bias2d)
    else:
        # Two-sweep fallback (1.5x HBM traffic) when one (N, c_blk, HW) channel
        # slab cannot stay resident in VMEM (e.g. large N*H*W on v7x's 64 MiB).
        new_rm2d = _channel_mean_update(x3d, rm2d, momentum, budget, cap)
        shift2d = bias2d - new_rm2d
        out3d = _apply_shift(x3d, shift2d, budget, cap)

    return out3d.reshape(N, C, H, W), new_rm2d.reshape(1, C, 1, 1)


# -----------------------------------------------------------------------------
# Self test
# -----------------------------------------------------------------------------
if __name__ == "__main__":
    N, C, H, W = 2, 4, 16, 16
    momentum = 0.1

    x = jax.random.normal(jax.random.PRNGKey(0), (N, C, H, W), dtype=jnp.float32)
    running_mean = jnp.zeros((1,), dtype=jnp.float32)          # register_buffer init
    bias = 0.1 * jax.random.normal(jax.random.PRNGKey(1), (1, C, 1, 1),
                                   dtype=jnp.float32)          # nn.Parameter

    # Pure-JAX reference mirroring the PyTorch forward.
    mean_ref = jnp.mean(x, axis=(0, 2, 3), keepdims=True)
    new_rm_ref = (1.0 - momentum) * running_mean.reshape(1, 1, 1, 1) + momentum * mean_ref
    out_train_ref = x - new_rm_ref + bias
    out_eval_ref = x - new_rm_ref + bias

    # --- training-mode forward, single fused pass ---
    out_train, new_rm = batch_centering_2d(
        x, running_mean, bias, momentum=momentum, training=True)
    jax.block_until_ready(out_train)
    jax.block_until_ready(new_rm)
    assert jnp.allclose(out_train, out_train_ref, atol=1e-5, rtol=1e-5)
    assert jnp.allclose(new_rm, new_rm_ref, atol=1e-6, rtol=1e-6)

    # --- training-mode forward, forced two-sweep fallback (tiny VMEM budget) ---
    out_train2, new_rm2 = batch_centering_2d(
        x, running_mean, bias, momentum=momentum, training=True,
        vmem_budget_bytes=1 << 10)
    jax.block_until_ready(out_train2)
    assert jnp.allclose(out_train2, out_train_ref, atol=1e-5, rtol=1e-5)
    assert jnp.allclose(new_rm2, new_rm_ref, atol=1e-6, rtol=1e-6)

    # --- eval-mode forward (default and forced multi-step tiling) ---
    out_eval = batch_centering_2d(x, new_rm, bias, momentum=momentum, training=False)
    jax.block_until_ready(out_eval)
    assert jnp.allclose(out_eval, out_eval_ref, atol=1e-5, rtol=1e-5)

    out_eval2 = batch_centering_2d(x, new_rm, bias, momentum=momentum, training=False,
                                   vmem_budget_bytes=1 << 10)
    jax.block_until_ready(out_eval2)
    assert jnp.allclose(out_eval2, out_eval_ref, atol=1e-5, rtol=1e-5)

    print("KERNEL_OK")
</pallas_src>

<mosaic_0001>
module attributes {stable_mosaic.version = 11 : i64} {
  func.func @_centering_train_kernel(%arg0: i32, %arg1: memref<2x4x256xf32, #tpu.memory_space<vmem>>, %arg2: memref<4x1xf32, #tpu.memory_space<vmem>>, %arg3: memref<4x1xf32, #tpu.memory_space<vmem>>, %arg4: memref<2x4x256xf32, #tpu.memory_space<vmem>>, %arg5: memref<4x1xf32, #tpu.memory_space<vmem>>) attributes {dimension_semantics = [#tpu.dimension_semantics<parallel>], iteration_bounds = array<i64: 1>, scalar_prefetch = 0 : i64, scratch_operands = 0 : i64, tpu.core_type = #tpu.core_type<tc>, window_params = [{transform_indices = @transform_0, window_bounds = array<i64: 2, 4, 256>}, {transform_indices = @transform_1, window_bounds = array<i64: 4, 1>}, {transform_indices = @transform_2, window_bounds = array<i64: 4, 1>}, {transform_indices = @transform_3, window_bounds = array<i64: 2, 4, 256>}, {transform_indices = @transform_4, window_bounds = array<i64: 4, 1>}]} {
    %cst = arith.constant 0.000000e+00 : f32
    %0 = vector.broadcast %cst : f32 to vector<4x256xf32>
    %c0_i32 = arith.constant 0 : i32
    %1 = arith.index_cast %c0_i32 : i32 to index
    %c0 = arith.constant 0 : index
    %c0_0 = arith.constant 0 : index
    %2 = vector.load %arg1[%1, %c0, %c0_0] : memref<2x4x256xf32, #tpu.memory_space<vmem>>, vector<1x4x256xf32>
    %3 = vector.shape_cast %2 : vector<1x4x256xf32> to vector<4x256xf32>
    %4 = arith.addf %0, %3 : vector<4x256xf32>
    %c1_i32 = arith.constant 1 : i32
    %5 = arith.index_cast %c1_i32 : i32 to index
    %c0_1 = arith.constant 0 : index
    %c0_2 = arith.constant 0 : index
    %6 = vector.load %arg1[%5, %c0_1, %c0_2] : memref<2x4x256xf32, #tpu.memory_space<vmem>>, vector<1x4x256xf32>
    %7 = vector.shape_cast %6 : vector<1x4x256xf32> to vector<4x256xf32>
    %8 = arith.addf %4, %7 : vector<4x256xf32>
    %c2_i32 = arith.constant 2 : i32
    %cst_3 = arith.constant dense<0.000000e+00> : vector<4xf32>
    %9 = vector.multi_reduction <add>, %8, %cst_3 [1] : vector<4x256xf32> to vector<4xf32>
    %10 = vector.shape_cast %9 : vector<4xf32> to vector<4x1xf32>
    %cst_4 = arith.constant 0.001953125 : f32
    %11 = vector.broadcast %cst_4 : f32 to vector<4x1xf32>
    %12 = arith.mulf %10, %11 : vector<4x1xf32>
    %c0_5 = arith.constant 0 : index
    %c0_6 = arith.constant 0 : index
    %13 = vector.load %arg2[%c0_5, %c0_6] : memref<4x1xf32, #tpu.memory_space<vmem>>, vector<4x1xf32>
    %cst_7 = arith.constant 0.899999976 : f32
    %14 = vector.broadcast %cst_7 : f32 to vector<4x1xf32>
    %15 = arith.mulf %14, %13 : vector<4x1xf32>
    %cst_8 = arith.constant 1.000000e-01 : f32
    %16 = vector.broadcast %cst_8 : f32 to vector<4x1xf32>
    %17 = arith.mulf %16, %12 : vector<4x1xf32>
    %18 = arith.addf %15, %17 : vector<4x1xf32>
    %c0_9 = arith.constant 0 : index
    %c0_10 = arith.constant 0 : index
    %19 = vector.load %arg5[%c0_9, %c0_10] : memref<4x1xf32, #tpu.memory_space<vmem>>, vector<4x1xf32>
    tpu.vector_store %arg5[%c0_9, %c0_10], %18 {strides = array<i32>} : memref<4x1xf32, #tpu.memory_space<vmem>>, vector<4x1xf32>,
    %c0_11 = arith.constant 0 : index
    %c0_12 = arith.constant 0 : index
    %20 = vector.load %arg3[%c0_11, %c0_12] : memref<4x1xf32, #tpu.memory_space<vmem>>, vector<4x1xf32>
    %21 = arith.subf %20, %18 : vector<4x1xf32>
    %c0_13 = arith.constant 0 : index
    %c0_14 = arith.constant 0 : index
    %c0_15 = arith.constant 0 : index
    %22 = vector.load %arg1[%c0_13, %c0_14, %c0_15] : memref<2x4x256xf32, #tpu.memory_space<vmem>>, vector<2x4x256xf32>
    %23 = vector.shape_cast %21 : vector<4x1xf32> to vector<1x4x1xf32>
    %24 = vector.broadcast %23 : vector<1x4x1xf32> to vector<2x4x256xf32>
    %25 = arith.addf %22, %24 : vector<2x4x256xf32>
    %c0_16 = arith.constant 0 : index
    %c0_17 = arith.constant 0 : index
    %c0_18 = arith.constant 0 : index
    %26 = vector.load %arg4[%c0_16, %c0_17, %c0_18] : memref<2x4x256xf32, #tpu.memory_space<vmem>>, vector<2x4x256xf32>
    tpu.vector_store %arg4[%c0_16, %c0_17, %c0_18], %25 {strides = array<i32>} : memref<2x4x256xf32, #tpu.memory_space<vmem>>, vector<2x4x256xf32>,
    return
  }
  func.func @transform_0(%arg0: i32) -> (i32, i32, i32) {
    %c0_i32 = arith.constant 0 : i32
    %c0_i32_0 = arith.constant 0 : i32
    %c0_i32_1 = arith.constant 0 : i32
    return %c0_i32, %arg0, %c0_i32_0 : i32, i32, i32
  }
  func.func @transform_1(%arg0: i32) -> (i32, i32) {
    %c0_i32 = arith.constant 0 : i32
    %c0_i32_0 = arith.constant 0 : i32
    return %arg0, %c0_i32 : i32, i32
  }
  func.func @transform_2(%arg0: i32) -> (i32, i32) {
    %c0_i32 = arith.constant 0 : i32
    %c0_i32_0 = arith.constant 0 : i32
    return %arg0, %c0_i32 : i32, i32
  }
  func.func @transform_3(%arg0: i32) -> (i32, i32, i32) {
    %c0_i32 = arith.constant 0 : i32
    %c0_i32_0 = arith.constant 0 : i32
    %c0_i32_1 = arith.constant 0 : i32
    return %c0_i32, %arg0, %c0_i32_0 : i32, i32, i32
  }
  func.func @transform_4(%arg0: i32) -> (i32, i32) {
    %c0_i32 = arith.constant 0 : i32
    %c0_i32_0 = arith.constant 0 : i32
    return %arg0, %c0_i32 : i32, i32
  }
}

</mosaic_0001>

<llo_original>
// kernel: tpu_custom_call.1
$region0: #{tpu_custom_call.1}
  #allocation0 [shape = 'u32[]', space=smem, size = 0x4, offset = 0x4, fixed_abs, tag = 'smem constant byte address 0x4 - core index']
  #allocation1 [shape = 'u32[144,128]{1,0:T(1,128)}', space=vmem, size = 0x12000, scoped, tag = 'internal scratch']
  %s0 = inlined_call_operand.hbm [shape: f32[2,4,256], index: 0, kind: input, shape index: {}]
  %s1 = inlined_call_operand.vmem [shape: f32[4,1], index: 1, kind: input, shape index: {}]
  %s2 = inlined_call_operand.vmem [shape: f32[4,1], index: 2, kind: input, shape index: {}]
  %s3 = inlined_call_operand.hbm [shape: f32[2,4,256], index: 3, kind: output, shape index: {0}]
  %s4 = inlined_call_operand.vmem [shape: f32[4,1], index: 4, kind: output, shape index: {1}]
  %5 = xla_tuple %s3, %s4
  %s6 = sld [smem:[#allocation0]]
  $region34: #{tpu_custom_call.1} parent=0
    _
  %s8 = ssub.s32 1, %s6
  %s9 = scalar_select 0, %s8, %s6
  $region1: #{tpu_custom_call.1} parent=0
    #allocation2 [shape = 'u8[8192]{0}', space=vmem, size = 0x2000, scoped, tag = 'input window, operand 0, single buffered']
    #allocation3 [shape = 's32[1]{0}', space=sflag, size = 0x4, scoped, tag = 'scoped memory for tpu_custom_call.1']
    #allocation4 [shape = 's32[1]{0}', space=sflag, size = 0x4, scoped, tag = 'scoped memory for tpu_custom_call.1']
    #allocation5 [shape = 'u8[8192]{0}', space=vmem, size = 0x2000, scoped, tag = 'output window, operand 0, single buffered']
    %10 = vsyncpa [#allocation3], 0
    %11 = vsyncpa [#allocation4], 0
    // Predicated region
    $region2: #{tpu_custom_call.1} parent=1 // pred_check
      _
    $region3: #{tpu_custom_call.1} parent=1 // pred_check_branch
      %13 = sbr.rel (0) target = $region5
    $region4: #{tpu_custom_call.1} parent=1 // pred_region
      %s15 = ssub.s32 256, 256
      %16 = vsyncadd [#allocation3], %s15
      %s17 = sshll.u32 [#allocation2], 4
      %s18 = int_to_ptr.vmem [resolvable:$true] %s17
      %23 = dma.hbm_to_vmem [thread:$0]  %s0, 256, %s18, [#allocation3], 128, 128, 8
    $region5: #{tpu_custom_call.1} parent=1 // pred_fallthru
      _
    // Predicated region
    $region6: #{tpu_custom_call.1} parent=1 // pred_check
      _
    $region7: #{tpu_custom_call.1} parent=1 // pred_check_branch
      %25 = sbr.rel (0) target = $region9
    $region8: #{tpu_custom_call.1} parent=1 // pred_region
      _
    $region9: #{tpu_custom_call.1} parent=1 // pred_fallthru
      _
    // Predicated region
    $region10: #{tpu_custom_call.1} parent=1 // pred_check
      _
    $region11: #{tpu_custom_call.1} parent=1 // pred_check_branch
      %27 = sbr.rel (0) target = $region13
    $region12: #{tpu_custom_call.1} parent=1 // pred_region
      _
    $region13: #{tpu_custom_call.1} parent=1 // pred_fallthru
      _
    // Predicated region
    $region14: #{tpu_custom_call.1} parent=1 // pred_check
      _
    $region15: #{tpu_custom_call.1} parent=1 // pred_check_branch
      %29 = sbr.rel (0) target = $region17
    $region16: #{tpu_custom_call.1} parent=1 // pred_region
      %30 = dma.done [#allocation3], 256
    $region17: #{tpu_custom_call.1} parent=1 // pred_fallthru
      _
    %v31 = vld [vmem:[#allocation2] sm:$0xff]
    %v32 = vadd.f32 %v31, 0.0
    %s33 = scalar_lea.vmem [#allocation2], 8
    %v34 = vld [vmem:[%s33] sm:$0xff]
    %v35 = vadd.f32 %v32, %v34
    %v37 = vcombine.high %v35, %v35
    %vm39 = vcmask 1043456
    %v40 = vsel %vm39, %v35, 0.0
    %v41 = vsel %vm39, %v37, 0.0
    %v42 = vadd.f32 %v40, %v41
    %43 = vadd.xlane.f32.xlu0 %v42
    %v44 = vpop.xlane.xlu0 %43
    %v45 = vmul.f32 %v44, 0.001953125
    %v46 = vld [vmem:[%s1] sm:$0xf]
    %v47 = vmul.f32 %v46, 0.9
    %v48 = vmul.f32 %v45, 0.1
    %v49 = vadd.f32 %v47, %v48
    %vm50 = vcmask 3072
    %51 = vst.msk [vmem:[%s4] sm:$0xf] %vm50, %v49
    %v52 = vld [vmem:[%s2] sm:$0xf]
    %v53 = vsub.f32 %v52, %v49
    %v54 = vld [vmem:[#allocation2] sm:$0xff]
    %v55 = vld [vmem:[#allocation2 + $0x8] sm:$0xff]
    %57 = vset.pattern.permute.xlu0 0
    %58 = vperm.xlu0 %57, %v53
    %v59 = vpop.permute.xlu0 %58
    %v61 = vunpack.c.l.s4 839922192
    %v62 = vunpack.c.0.s8 %v61
    %v63 = vlaneseq
    %v64 = vshrl.u32 %v63, 7
    %v65 = vsub.s32 %v62, %v64
    %v66 = vrot.slane %v59, %v65
    %v68 = vadd.f32 %v54, %v66
    %v69 = vadd.f32 %v55, %v66
    %70 = vst [vmem:[#allocation5] sm:$0xff] %v68
    %71 = vst [vmem:[#allocation5 + $0x8] sm:$0xff] %v69
    // Predicated region
    $region18: #{tpu_custom_call.1} parent=1 // pred_check
      _
    $region19: #{tpu_custom_call.1} parent=1 // pred_check_branch
      %73 = sbr.rel (0) target = $region21
    $region20: #{tpu_custom_call.1} parent=1 // pred_region
      %s75 = ssub.s32 256, 256
      %76 = vsyncadd [#allocation4], %s75
      %s77 = sshll.u32 [#allocation5], 4
      %s78 = int_to_ptr.vmem [resolvable:$true] %s77
      %83 = dma.vmem_to_hbm [thread:$0]  %s78, 256, %s3, [#allocation4], 128, 128, 8
    $region21: #{tpu_custom_call.1} parent=1 // pred_fallthru
      _
    // Predicated region
    $region22: #{tpu_custom_call.1} parent=1 // pred_check
      _
    $region23: #{tpu_custom_call.1} parent=1 // pred_check_branch
      %85 = sbr.rel (0) target = $region25
    $region24: #{tpu_custom_call.1} parent=1 // pred_region
      _
    $region25: #{tpu_custom_call.1} parent=1 // pred_fallthru
      _
    // Predicated region
    $region26: #{tpu_custom_call.1} parent=1 // pred_check
      _
    $region27: #{tpu_custom_call.1} parent=1 // pred_check_branch
      %87 = sbr.rel (0) target = $region29
    $region28: #{tpu_custom_call.1} parent=1 // pred_region
      %88 = dma.done [#allocation4], 256
    $region29: #{tpu_custom_call.1} parent=1 // pred_fallthru
      _
    // Predicated region
    $region30: #{tpu_custom_call.1} parent=1 // pred_check
      _
    $region31: #{tpu_custom_call.1} parent=1 // pred_check_branch
      %90 = sbr.rel (0) target = $region33
    $region32: #{tpu_custom_call.1} parent=1 // pred_region
      _
    $region33: #{tpu_custom_call.1} parent=1 // pred_fallthru
      _
    %91 = vsyncpa [#allocation3], 1
    %92 = vsyncpa [#allocation4], 1

</llo_original>
